<compile_context>
chip_gen: v7x
topology: tpu7x:2x2x1
jax: 0.10.0
libtpu: 0.0.40
codegen_flags: <defaults>
</compile_context>

<pallas_src>
import functools

import jax
import jax.numpy as jnp
from jax.experimental import pallas as pl
from jax.experimental.pallas import tpu as pltpu  # noqa: F401  (TPU backend)

HIDDEN_FUSED = 128   # 2*H = 64 padded up to one full 128-lane tile
OUT_PAD = 128        # A q-values padded to 128 lanes (lane-dense output)


def dueling_kernel(x_ref, w1_ref, w2_ref, b_ref, out_ref):
    # x: (Bp, D) bf16 ; w1: (D, 128) bf16
    # w2: (128, 128) f32  = block-diag second layer folded with the dueling
    #                       combine matrix (value + advantage - mean)
    # b:  (2, 128) f32    = [fused first-layer bias ; folded second bias]
    # out: (Bp, 128) f32  ; valid Q-values in lanes 0..A-1.
    h = jnp.dot(x_ref[...], w1_ref[...], preferred_element_type=jnp.float32)
    h = jnp.maximum(h + b_ref[0:1, :], 0.0)                       # (Bp, 128) f32
    q = jnp.dot(h, w2_ref[...], preferred_element_type=jnp.float32) + b_ref[1:2, :]
    out_ref[...] = q.astype(out_ref.dtype)


def pack_params(params, hidden, n_actions):
    """Fuse + pad branch weights and fold the dueling combine. Call ONCE and
    cache the result; do not rebuild per forward call."""
    w1v, b1v, w2v, b2v, w1a, b1a, w2a, b2a = params
    d_in = w1v.shape[0]
    assert 2 * hidden <= HIDDEN_FUSED, "hidden branches do not fit the fused tile"
    assert 1 + n_actions <= OUT_PAD, "value + advantages do not fit one lane tile"

    # Fused first layer: [w1v | w1a | 0-pad], bf16 storage (MXU inputs only).
    w1p = (jnp.zeros((d_in, HIDDEN_FUSED), jnp.float32)
           .at[:, :hidden].set(w1v)
           .at[:, hidden:2 * hidden].set(w1a)
           .astype(jnp.bfloat16))
    b1p = (jnp.zeros((HIDDEN_FUSED,), jnp.float32)
           .at[:hidden].set(b1v[0])
           .at[hidden:2 * hidden].set(b1a[0]))

    # Block-diagonal second layer: z[:, 0] = value, z[:, 1:1+A] = advantages.
    w2p = (jnp.zeros((HIDDEN_FUSED, OUT_PAD), jnp.float32)
           .at[:hidden, 0].set(w2v[:, 0])
           .at[hidden:2 * hidden, 1:1 + n_actions].set(w2a))
    b2p = (jnp.zeros((OUT_PAD,), jnp.float32)
           .at[0].set(b2v[0, 0])
           .at[1:1 + n_actions].set(b2a[0]))

    # Dueling combine matrix C:  (z @ C)[:, j] = v + a_j - mean(a),  j < A.
    comb = jnp.zeros((OUT_PAD, OUT_PAD), jnp.float32)
    comb = comb.at[0, :n_actions].set(1.0)
    comb = comb.at[1:1 + n_actions, :n_actions].set(
        jnp.eye(n_actions, dtype=jnp.float32) - 1.0 / n_actions)

    # Exact algebraic fold, computed and KEPT in f32 (64 KiB).
    w2f = w2p @ comb                      # (128, 128) f32
    b2f = b2p @ comb                      # (128,)     f32

    biases = jnp.stack([b1p, b2f], axis=0)   # single (2, 128) f32 operand
    return w1p, w2f, biases


@functools.partial(jax.jit, static_argnames=("n_actions",))
def dueling_forward(x_nchw, w1p, w2f, biases, *, n_actions):
    """x_nchw: (B, C, H, W) float32.  Returns Q-values (B, A) float32."""
    B = x_nchw.shape[0]
    x_flat = x_nchw.reshape(B, -1)                  # nn.Flatten (row-major C,H,W)
    D = x_flat.shape[1]

    # Pad batch to a full sublane multiple -> unmasked, sublane-aligned tiles.
    Bp = max(8, ((B + 7) // 8) * 8)
    x_p = jnp.pad(x_flat.astype(jnp.bfloat16), ((0, Bp - B), (0, 0)))

    args = (x_p, w1p, w2f, biases)
    full = lambda arr: pl.BlockSpec(arr.shape, lambda: (0,) * arr.ndim)

    out = pl.pallas_call(
        dueling_kernel,
        out_shape=jax.ShapeDtypeStruct((Bp, OUT_PAD), jnp.float32),
        grid=(),
        in_specs=[full(a) for a in args],
        out_specs=pl.BlockSpec((Bp, OUT_PAD), lambda: (0, 0)),
    )(*args)

    # Folded combine puts the A valid Q-values in lanes 0..A-1.
    return out[:B, :n_actions]


def init_params(key, d_in, hidden, n_actions):
    """Deterministic synthetic weights (roughly Kaiming-uniform scale)."""
    ks = jax.random.split(key, 8)

    def lin(kw, kb, fan_in, fan_out):
        bound = 1.0 / jnp.sqrt(fan_in)
        w = jax.random.uniform(kw, (fan_in, fan_out), jnp.float32, -bound, bound)
        b = jax.random.uniform(kb, (1, fan_out), jnp.float32, -bound, bound)
        return w, b

    w1v, b1v = lin(ks[0], ks[1], d_in, hidden)
    w2v, b2v = lin(ks[2], ks[3], hidden, 1)
    w1a, b1a = lin(ks[4], ks[5], d_in, hidden)
    w2a, b2a = lin(ks[6], ks[7], hidden, n_actions)
    return (w1v, b1v, w2v, b2v, w1a, b1a, w2a, b2a)


def dueling_reference(x_nchw, params):
    """Pure-JAX reference mirroring the PyTorch forward with the SAME bf16
    storage quantization the kernel applies to x and the first-layer weights
    (first matmuls accumulate in f32; second layer and combine stay f32)."""
    w1v, b1v, w2v, b2v, w1a, b1a, w2a, b2a = params
    x = x_nchw.reshape(x_nchw.shape[0], -1)
    q16 = lambda a: a.astype(jnp.bfloat16).astype(jnp.float32)
    hp = jax.lax.Precision.HIGHEST

    xq = q16(x)
    hv = jnp.maximum(jnp.dot(xq, q16(w1v), precision=hp) + b1v, 0.0)
    ha = jnp.maximum(jnp.dot(xq, q16(w1a), precision=hp) + b1a, 0.0)
    v = jnp.dot(hv, w2v, precision=hp) + b2v
    a = jnp.dot(ha, w2a, precision=hp) + b2a
    return v + (a - jnp.mean(a, axis=1, keepdims=True))


if __name__ == "__main__":
    key = jax.random.PRNGKey(0)
    k_x, k_p = jax.random.split(key)

    B, C, H, W = 2, 4, 16, 16          # NCHW input, flattened D = 1024
    hidden, n_actions = 32, 8

    x = jax.random.normal(k_x, (B, C, H, W), jnp.float32)
    params = init_params(k_p, C * H * W, hidden, n_actions)

    # Pack/fold ONCE (weights are static across inference steps).
    w1p, w2f, biases = jax.block_until_ready(
        pack_params(params, hidden, n_actions))

    q = jax.block_until_ready(
        dueling_forward(x, w1p, w2f, biases, n_actions=n_actions))
    q_ref = dueling_reference(x, params)

    assert q.shape == (B, n_actions)
    # Tolerance covers bf16 storage of x/W1, the f32 reassociation of the
    # combine fold, and any multi-pass f32 MXU rounding in the second matmul.
    assert jnp.allclose(q, q_ref, atol=5e-3, rtol=5e-3), "mismatch vs reference"
    print("KERNEL_OK")
</pallas_src>

<mosaic_0001>
module attributes {stable_mosaic.version = 11 : i64} {
  func.func @dueling_kernel(%arg0: memref<8x1024xbf16, #tpu.memory_space<vmem>>, %arg1: memref<1024x128xbf16, #tpu.memory_space<vmem>>, %arg2: memref<128x128xf32, #tpu.memory_space<vmem>>, %arg3: memref<2x128xf32, #tpu.memory_space<vmem>>, %arg4: memref<8x128xf32, #tpu.memory_space<vmem>>) attributes {dimension_semantics = [], scalar_prefetch = 0 : i64, scratch_operands = 0 : i64, tpu.core_type = #tpu.core_type<tc>} {
    %c0 = arith.constant 0 : index
    %c0_0 = arith.constant 0 : index
    %0 = vector.load %arg0[%c0, %c0_0] : memref<8x1024xbf16, #tpu.memory_space<vmem>>, vector<8x1024xbf16>
    %c0_1 = arith.constant 0 : index
    %c0_2 = arith.constant 0 : index
    %1 = vector.load %arg1[%c0_1, %c0_2] : memref<1024x128xbf16, #tpu.memory_space<vmem>>, vector<1024x128xbf16>
    %cst = arith.constant dense<0.000000e+00> : vector<8x128xf32>
    %2 = tpu.matmul %0, %1, %cst {dimension_numbers = #tpu.dot_dimension_numbers<[1], [0], [0], [1], [0, 0, 1, 1], [], []>} : vector<8x1024xbf16>, vector<1024x128xbf16>, vector<8x128xf32> -> vector<8x128xf32>
    %c0_3 = arith.constant 0 : index
    %c0_4 = arith.constant 0 : index
    %3 = vector.load %arg3[%c0_3, %c0_4] : memref<2x128xf32, #tpu.memory_space<vmem>>, vector<1x128xf32>
    %4 = vector.broadcast %3 : vector<1x128xf32> to vector<8x128xf32>
    %5 = arith.addf %2, %4 : vector<8x128xf32>
    %cst_5 = arith.constant 0.000000e+00 : f32
    %6 = vector.broadcast %cst_5 : f32 to vector<8x128xf32>
    %7 = arith.maximumf %5, %6 : vector<8x128xf32>
    %c0_6 = arith.constant 0 : index
    %c0_7 = arith.constant 0 : index
    %8 = vector.load %arg2[%c0_6, %c0_7] : memref<128x128xf32, #tpu.memory_space<vmem>>, vector<128x128xf32>
    %cst_8 = arith.constant dense<0.000000e+00> : vector<8x128xf32>
    %9 = tpu.matmul %7, %8, %cst_8 {dimension_numbers = #tpu.dot_dimension_numbers<[1], [0], [0], [1], [0, 0, 1, 1], [], []>} : vector<8x128xf32>, vector<128x128xf32>, vector<8x128xf32> -> vector<8x128xf32>
    %c1 = arith.constant 1 : index
    %c0_9 = arith.constant 0 : index
    %10 = vector.load %arg3[%c1, %c0_9] : memref<2x128xf32, #tpu.memory_space<vmem>>, vector<1x128xf32>
    %11 = vector.broadcast %10 : vector<1x128xf32> to vector<8x128xf32>
    %12 = arith.addf %9, %11 : vector<8x128xf32>
    %c0_10 = arith.constant 0 : index
    %c0_11 = arith.constant 0 : index
    %13 = vector.load %arg4[%c0_10, %c0_11] : memref<8x128xf32, #tpu.memory_space<vmem>>, vector<8x128xf32>
    tpu.vector_store %arg4[%c0_10, %c0_11], %12 {strides = array<i32>} : memref<8x128xf32, #tpu.memory_space<vmem>>, vector<8x128xf32>,
    return
  }
}

</mosaic_0001>

<llo_original>
// kernel: dueling_forward.1
$region0: #{dueling_forward.1}
  #allocation0 [shape = 'u32[]', space=smem, size = 0x4, offset = 0x4, fixed_abs, tag = 'smem constant byte address 0x4 - core index']
  #allocation1 [shape = 'u32[144,128]{1,0:T(1,128)}', space=vmem, size = 0x12000, scoped, tag = 'internal scratch']
  %s0 = inlined_call_operand.vmem [shape: bf16[8,1024], index: 0, kind: input, shape index: {}]
  %s1 = inlined_call_operand.hbm [shape: bf16[1024,128], index: 1, kind: input, shape index: {}]
  %s2 = inlined_call_operand.vmem [shape: f32[128,128], index: 2, kind: input, shape index: {}]
  %s3 = inlined_call_operand.vmem [shape: f32[2,128], index: 3, kind: input, shape index: {}]
  %s4 = inlined_call_operand.vmem [shape: f32[8,128], index: 4, kind: output, shape index: {}]
  %s5 = sld [smem:[#allocation0]]
  $region30: #{dueling_forward.1} parent=0
    _
  %s7 = ssub.s32 1, %s5
  %s8 = scalar_select 0, %s7, %s5
  $region1: #{dueling_forward.1} parent=0
    #allocation2 [shape = 'u8[262144]{0}', space=vmem, size = 0x40000, scoped, tag = 'input window, operand 1, single buffered']
    #allocation3 [shape = 's32[1]{0}', space=sflag, size = 0x4, scoped, tag = 'scoped memory for dueling_forward.1']
    %9 = vsyncpa [#allocation3], 0
    // Predicated region
    $region2: #{dueling_forward.1} parent=1 // pred_check
      _
    $region3: #{dueling_forward.1} parent=1 // pred_check_branch
      %11 = sbr.rel (0) target = $region5
    $region4: #{dueling_forward.1} parent=1 // pred_region
      _
    $region5: #{dueling_forward.1} parent=1 // pred_fallthru
      _
    // Predicated region
    $region6: #{dueling_forward.1} parent=1 // pred_check
      _
    $region7: #{dueling_forward.1} parent=1 // pred_check_branch
      %13 = sbr.rel (0) target = $region9
    $region8: #{dueling_forward.1} parent=1 // pred_region
      %s15 = ssub.s32 8192, 8192
      %16 = vsyncadd [#allocation3], %s15
      %s17 = sshll.u32 [#allocation2], 4
      %s18 = int_to_ptr.vmem [resolvable:$true] %s17
      %23 = dma.hbm_to_vmem [thread:$0]  %s1, 8192, %s18, [#allocation3], 64, 64, 4
    $region9: #{dueling_forward.1} parent=1 // pred_fallthru
      _
    // Predicated region
    $region10: #{dueling_forward.1} parent=1 // pred_check
      _
    $region11: #{dueling_forward.1} parent=1 // pred_check_branch
      %25 = sbr.rel (0) target = $region13
    $region12: #{dueling_forward.1} parent=1 // pred_region
      _
    $region13: #{dueling_forward.1} parent=1 // pred_fallthru
      _
    // Predicated region
    $region14: #{dueling_forward.1} parent=1 // pred_check
      _
    $region15: #{dueling_forward.1} parent=1 // pred_check_branch
      %27 = sbr.rel (0) target = $region17
    $region16: #{dueling_forward.1} parent=1 // pred_region
      _
    $region17: #{dueling_forward.1} parent=1 // pred_fallthru
      _
    // Predicated region
    $region18: #{dueling_forward.1} parent=1 // pred_check
      _
    $region19: #{dueling_forward.1} parent=1 // pred_check_branch
      %29 = sbr.rel (0) target = $region21
    $region20: #{dueling_forward.1} parent=1 // pred_region
      %30 = dma.done [#allocation3], 8192
    $region21: #{dueling_forward.1} parent=1 // pred_fallthru
      _
    %v32 = vld [vmem:[%s0] sm:$0xff]
    %v33 = vld [vmem:[%s0 + $0x8] sm:$0xff]
    %v34 = vld [vmem:[%s0 + $0x10] sm:$0xff]
    %v35 = vld [vmem:[%s0 + $0x18] sm:$0xff]
    %v36 = vld [vmem:[#allocation2] sm:$0xf]
    %v37 = vld [vmem:[#allocation2 + $0x4] sm:$0xf]
    %v38 = vld [vmem:[#allocation2 + $0x8] sm:$0xf]
    %v39 = vld [vmem:[#allocation2 + $0xc] sm:$0xf]
    %v40 = vld [vmem:[#allocation2 + $0x10] sm:$0xf]
    %v41 = vld [vmem:[#allocation2 + $0x14] sm:$0xf]
    %v42 = vld [vmem:[#allocation2 + $0x18] sm:$0xf]
    %v43 = vld [vmem:[#allocation2 + $0x1c] sm:$0xf]
    %v44 = vld [vmem:[#allocation2 + $0x20] sm:$0xf]
    %v45 = vld [vmem:[#allocation2 + $0x24] sm:$0xf]
    %v46 = vld [vmem:[#allocation2 + $0x28] sm:$0xf]
    %v47 = vld [vmem:[#allocation2 + $0x2c] sm:$0xf]
    %v48 = vld [vmem:[#allocation2 + $0x30] sm:$0xf]
    %v49 = vld [vmem:[#allocation2 + $0x34] sm:$0xf]
    %v50 = vld [vmem:[#allocation2 + $0x38] sm:$0xf]
    %v51 = vld [vmem:[#allocation2 + $0x3c] sm:$0xf]
    %v52 = vld [vmem:[#allocation2 + $0x40] sm:$0xf]
    %v53 = vld [vmem:[#allocation2 + $0x44] sm:$0xf]
    %v54 = vld [vmem:[#allocation2 + $0x48] sm:$0xf]
    %v55 = vld [vmem:[#allocation2 + $0x4c] sm:$0xf]
    %v56 = vld [vmem:[#allocation2 + $0x50] sm:$0xf]
    %v57 = vld [vmem:[#allocation2 + $0x54] sm:$0xf]
    %v58 = vld [vmem:[#allocation2 + $0x58] sm:$0xf]
    %v59 = vld [vmem:[#allocation2 + $0x5c] sm:$0xf]
    %v60 = vld [vmem:[#allocation2 + $0x60] sm:$0xf]
    %v61 = vld [vmem:[#allocation2 + $0x64] sm:$0xf]
    %v62 = vld [vmem:[#allocation2 + $0x68] sm:$0xf]
    %v63 = vld [vmem:[#allocation2 + $0x6c] sm:$0xf]
    %v64 = vld [vmem:[#allocation2 + $0x70] sm:$0xf]
    %v65 = vld [vmem:[#allocation2 + $0x74] sm:$0xf]
    %v66 = vld [vmem:[#allocation2 + $0x78] sm:$0xf]
    %v67 = vld [vmem:[#allocation2 + $0x7c] sm:$0xf]
    %v68 = vld [vmem:[#allocation2 + $0x80] sm:$0xf]
    %v69 = vld [vmem:[#allocation2 + $0x84] sm:$0xf]
    %v70 = vld [vmem:[#allocation2 + $0x88] sm:$0xf]
    %v71 = vld [vmem:[#allocation2 + $0x8c] sm:$0xf]
    %v72 = vld [vmem:[#allocation2 + $0x90] sm:$0xf]
    %v73 = vld [vmem:[#allocation2 + $0x94] sm:$0xf]
    %v74 = vld [vmem:[#allocation2 + $0x98] sm:$0xf]
    %v75 = vld [vmem:[#allocation2 + $0x9c] sm:$0xf]
    %v76 = vld [vmem:[#allocation2 + $0xa0] sm:$0xf]
    %v77 = vld [vmem:[#allocation2 + $0xa4] sm:$0xf]
    %v78 = vld [vmem:[#allocation2 + $0xa8] sm:$0xf]
    %v79 = vld [vmem:[#allocation2 + $0xac] sm:$0xf]
    %v80 = vld [vmem:[#allocation2 + $0xb0] sm:$0xf]
    %v81 = vld [vmem:[#allocation2 + $0xb4] sm:$0xf]
    %v82 = vld [vmem:[#allocation2 + $0xb8] sm:$0xf]
    %v83 = vld [vmem:[#allocation2 + $0xbc] sm:$0xf]
    %v84 = vld [vmem:[#allocation2 + $0xc0] sm:$0xf]
    %v85 = vld [vmem:[#allocation2 + $0xc4] sm:$0xf]
    %v86 = vld [vmem:[#allocation2 + $0xc8] sm:$0xf]
    %v87 = vld [vmem:[#allocation2 + $0xcc] sm:$0xf]
    %v88 = vld [vmem:[#allocation2 + $0xd0] sm:$0xf]
    %v89 = vld [vmem:[#allocation2 + $0xd4] sm:$0xf]
    %v90 = vld [vmem:[#allocation2 + $0xd8] sm:$0xf]
    %v91 = vld [vmem:[#allocation2 + $0xdc] sm:$0xf]
    %v92 = vld [vmem:[#allocation2 + $0xe0] sm:$0xf]
    %v93 = vld [vmem:[#allocation2 + $0xe4] sm:$0xf]
    %v94 = vld [vmem:[#allocation2 + $0xe8] sm:$0xf]
    %v95 = vld [vmem:[#allocation2 + $0xec] sm:$0xf]
    %v96 = vld [vmem:[#allocation2 + $0xf0] sm:$0xf]
    %v97 = vld [vmem:[#allocation2 + $0xf4] sm:$0xf]
    %v98 = vld [vmem:[#allocation2 + $0xf8] sm:$0xf]
    %v99 = vld [vmem:[#allocation2 + $0xfc] sm:$0xf]
    %v100 = vld [vmem:[#allocation2 + $0x100] sm:$0xf]
    %v101 = vld [vmem:[#allocation2 + $0x104] sm:$0xf]
    %v102 = vld [vmem:[#allocation2 + $0x108] sm:$0xf]
    %v103 = vld [vmem:[#allocation2 + $0x10c] sm:$0xf]
    %v104 = vld [vmem:[#allocation2 + $0x110] sm:$0xf]
    %v105 = vld [vmem:[#allocation2 + $0x114] sm:$0xf]
    %v106 = vld [vmem:[#allocation2 + $0x118] sm:$0xf]
    %v107 = vld [vmem:[#allocation2 + $0x11c] sm:$0xf]
    %v108 = vld [vmem:[#allocation2 + $0x120] sm:$0xf]
    %v109 = vld [vmem:[#allocation2 + $0x124] sm:$0xf]
    %v110 = vld [vmem:[#allocation2 + $0x128] sm:$0xf]
    %v111 = vld [vmem:[#allocation2 + $0x12c] sm:$0xf]
    %v112 = vld [vmem:[#allocation2 + $0x130] sm:$0xf]
    %v113 = vld [vmem:[#allocation2 + $0x134] sm:$0xf]
    %v114 = vld [vmem:[#allocation2 + $0x138] sm:$0xf]
    %v115 = vld [vmem:[#allocation2 + $0x13c] sm:$0xf]
    %v116 = vld [vmem:[#allocation2 + $0x140] sm:$0xf]
    %v117 = vld [vmem:[#allocation2 + $0x144] sm:$0xf]
    %v118 = vld [vmem:[#allocation2 + $0x148] sm:$0xf]
    %v119 = vld [vmem:[#allocation2 + $0x14c] sm:$0xf]
    %v120 = vld [vmem:[#allocation2 + $0x150] sm:$0xf]
    %v121 = vld [vmem:[#allocation2 + $0x154] sm:$0xf]
    %v122 = vld [vmem:[#allocation2 + $0x158] sm:$0xf]
    %v123 = vld [vmem:[#allocation2 + $0x15c] sm:$0xf]
    %v124 = vld [vmem:[#allocation2 + $0x160] sm:$0xf]
    %v125 = vld [vmem:[#allocation2 + $0x164] sm:$0xf]
    %v126 = vld [vmem:[#allocation2 + $0x168] sm:$0xf]
    %v127 = vld [vmem:[#allocation2 + $0x16c] sm:$0xf]
    %v128 = vld [vmem:[#allocation2 + $0x170] sm:$0xf]
    %v129 = vld [vmem:[#allocation2 + $0x174] sm:$0xf]
    %v130 = vld [vmem:[#allocation2 + $0x178] sm:$0xf]
    %v131 = vld [vmem:[#allocation2 + $0x17c] sm:$0xf]
    %v132 = vld [vmem:[#allocation2 + $0x180] sm:$0xf]
    %v133 = vld [vmem:[#allocation2 + $0x184] sm:$0xf]
    %v134 = vld [vmem:[#allocation2 + $0x188] sm:$0xf]
    %v135 = vld [vmem:[#allocation2 + $0x18c] sm:$0xf]
    %v136 = vld [vmem:[#allocation2 + $0x190] sm:$0xf]
    %v137 = vld [vmem:[#allocation2 + $0x194] sm:$0xf]
    %v138 = vld [vmem:[#allocation2 + $0x198] sm:$0xf]
    %v139 = vld [vmem:[#allocation2 + $0x19c] sm:$0xf]
    %v140 = vld [vmem:[#allocation2 + $0x1a0] sm:$0xf]
    %v141 = vld [vmem:[#allocation2 + $0x1a4] sm:$0xf]
    %v142 = vld [vmem:[#allocation2 + $0x1a8] sm:$0xf]
    %v143 = vld [vmem:[#allocation2 + $0x1ac] sm:$0xf]
    %v144 = vld [vmem:[#allocation2 + $0x1b0] sm:$0xf]
    %v145 = vld [vmem:[#allocation2 + $0x1b4] sm:$0xf]
    %v146 = vld [vmem:[#allocation2 + $0x1b8] sm:$0xf]
    %v147 = vld [vmem:[#allocation2 + $0x1bc] sm:$0xf]
    %v148 = vld [vmem:[#allocation2 + $0x1c0] sm:$0xf]
    %v149 = vld [vmem:[#allocation2 + $0x1c4] sm:$0xf]
    %v150 = vld [vmem:[#allocation2 + $0x1c8] sm:$0xf]
    %v151 = vld [vmem:[#allocation2 + $0x1cc] sm:$0xf]
    %v152 = vld [vmem:[#allocation2 + $0x1d0] sm:$0xf]
    %v153 = vld [vmem:[#allocation2 + $0x1d4] sm:$0xf]
    %v154 = vld [vmem:[#allocation2 + $0x1d8] sm:$0xf]
    %v155 = vld [vmem:[#allocation2 + $0x1dc] sm:$0xf]
    %v156 = vld [vmem:[#allocation2 + $0x1e0] sm:$0xf]
    %v157 = vld [vmem:[#allocation2 + $0x1e4] sm:$0xf]
    %v158 = vld [vmem:[#allocation2 + $0x1e8] sm:$0xf]
    %v159 = vld [vmem:[#allocation2 + $0x1ec] sm:$0xf]
    %v160 = vld [vmem:[#allocation2 + $0x1f0] sm:$0xf]
    %v161 = vld [vmem:[#allocation2 + $0x1f4] sm:$0xf]
    %v162 = vld [vmem:[#allocation2 + $0x1f8] sm:$0xf]
    %v163 = vld [vmem:[#allocation2 + $0x1fc] sm:$0xf]
    %v164 = vld [vmem:[%s3] sm:$0x1]
    %v165 = vlaneseq
    %v166 = vshrl.u32 %v165, 7
    %v167 = vsub.s32 0, %v166
    %v168 = vrot.slane %v164, %v167
    %v173 = vunpack.c.l.b16 %v32
    %v174 = vunpack.c.h.b16 %v32
    %v175 = vunpack.c.l.b16 %v33
    %v176 = vunpack.c.h.b16 %v33
    %v177 = vunpack.c.l.b16 %v34
    %v178 = vunpack.c.h.b16 %v34
    %v179 = vunpack.c.l.b16 %v35
    %v180 = vunpack.c.h.b16 %v35
    %v181 = vpack.c.b16 %v173, %v173
    %v182 = vpack.c.b16 %v174, %v174
    %v183 = vpack.c.b16 %v175, %v175
    %v184 = vpack.c.b16 %v176, %v176
    %v185 = vpack.c.b16 %v177, %v177
    %v186 = vpack.c.b16 %v178, %v178
    %v187 = vpack.c.b16 %v179, %v179
    %v188 = vpack.c.b16 %v180, %v180
    %v325 = vunpack.c.l.b16 %v36
    %v326 = vunpack.c.l.b16 %v37
    %v327 = vunpack.c.l.b16 %v38
    %v328 = vunpack.c.l.b16 %v39
    %v329 = vunpack.c.l.b16 %v40
    %v330 = vunpack.c.l.b16 %v41
    %v331 = vunpack.c.l.b16 %v42
    %v332 = vunpack.c.l.b16 %v43
    %v333 = vunpack.c.l.b16 %v44
    %v334 = vunpack.c.l.b16 %v45
    %v335 = vunpack.c.l.b16 %v46
    %v336 = vunpack.c.l.b16 %v47
    %v337 = vunpack.c.l.b16 %v48
    %v338 = vunpack.c.l.b16 %v49
    %v339 = vunpack.c.l.b16 %v50
    %v340 = vunpack.c.l.b16 %v51
    %v341 = vunpack.c.l.b16 %v52
    %v342 = vunpack.c.l.b16 %v53
    %v343 = vunpack.c.l.b16 %v54
    %v344 = vunpack.c.l.b16 %v55
    %v345 = vunpack.c.l.b16 %v56
    %v346 = vunpack.c.l.b16 %v57
    %v347 = vunpack.c.l.b16 %v58
    %v348 = vunpack.c.l.b16 %v59
    %v349 = vunpack.c.l.b16 %v60
    %v350 = vunpack.c.l.b16 %v61
    %v351 = vunpack.c.l.b16 %v62
    %v352 = vunpack.c.l.b16 %v63
    %v353 = vunpack.c.l.b16 %v64
    %v354 = vunpack.c.l.b16 %v65
    %v355 = vunpack.c.l.b16 %v66
    %v356 = vunpack.c.l.b16 %v67
    %v357 = vunpack.c.l.b16 %v68
    %v358 = vunpack.c.l.b16 %v69
    %v359 = vunpack.c.l.b16 %v70
    %v360 = vunpack.c.l.b16 %v71
    %v361 = vunpack.c.l.b16 %v72
    %v362 = vunpack.c.l.b16 %v73
    %v363 = vunpack.c.l.b16 %v74
    %v364 = vunpack.c.l.b16 %v75
    %v365 = vunpack.c.l.b16 %v76
    %v366 = vunpack.c.l.b16 %v77
    %v367 = vunpack.c.l.b16 %v78
    %v368 = vunpack.c.l.b16 %v79
    %v369 = vunpack.c.l.b16 %v80
    %v370 = vunpack.c.l.b16 %v81
    %v371 = vunpack.c.l.b16 %v82
    %v372 = vunpack.c.l.b16 %v83
    %v373 = vunpack.c.l.b16 %v84
    %v374 = vunpack.c.l.b16 %v85
    %v375 = vunpack.c.l.b16 %v86
    %v376 = vunpack.c.l.b16 %v87
    %v377 = vunpack.c.l.b16 %v88
    %v378 = vunpack.c.l.b16 %v89
    %v379 = vunpack.c.l.b16 %v90
    %v380 = vunpack.c.l.b16 %v91
    %v381 = vunpack.c.l.b16 %v92
    %v382 = vunpack.c.l.b16 %v93
    %v383 = vunpack.c.l.b16 %v94
    %v384 = vunpack.c.l.b16 %v95
    %v385 = vunpack.c.l.b16 %v96
    %v386 = vunpack.c.l.b16 %v97
    %v387 = vunpack.c.l.b16 %v98
    %v388 = vunpack.c.l.b16 %v99
    %v389 = vunpack.c.l.b16 %v100
    %v390 = vunpack.c.l.b16 %v101
    %v391 = vunpack.c.l.b16 %v102
    %v392 = vunpack.c.l.b16 %v103
    %v393 = vunpack.c.l.b16 %v104
    %v394 = vunpack.c.l.b16 %v105
    %v395 = vunpack.c.l.b16 %v106
    %v396 = vunpack.c.l.b16 %v107
    %v397 = vunpack.c.l.b16 %v108
    %v398 = vunpack.c.l.b16 %v109
    %v399 = vunpack.c.l.b16 %v110
    %v400 = vunpack.c.l.b16 %v111
    %v401 = vunpack.c.l.b16 %v112
    %v402 = vunpack.c.l.b16 %v113
    %v403 = vunpack.c.l.b16 %v114
    %v404 = vunpack.c.l.b16 %v115
    %v405 = vunpack.c.l.b16 %v116
    %v406 = vunpack.c.l.b16 %v117
    %v407 = vunpack.c.l.b16 %v118
    %v408 = vunpack.c.l.b16 %v119
    %v409 = vunpack.c.l.b16 %v120
    %v410 = vunpack.c.l.b16 %v121
    %v411 = vunpack.c.l.b16 %v122
    %v412 = vunpack.c.l.b16 %v123
    %v413 = vunpack.c.l.b16 %v124
    %v414 = vunpack.c.l.b16 %v125
    %v415 = vunpack.c.l.b16 %v126
    %v416 = vunpack.c.l.b16 %v127
    %v417 = vunpack.c.l.b16 %v128
    %v418 = vunpack.c.l.b16 %v129
    %v419 = vunpack.c.l.b16 %v130
    %v420 = vunpack.c.l.b16 %v131
    %v421 = vunpack.c.l.b16 %v132
    %v422 = vunpack.c.l.b16 %v133
    %v423 = vunpack.c.l.b16 %v134
    %v424 = vunpack.c.l.b16 %v135
    %v425 = vunpack.c.l.b16 %v136
    %v426 = vunpack.c.l.b16 %v137
    %v427 = vunpack.c.l.b16 %v138
    %v428 = vunpack.c.l.b16 %v139
    %v429 = vunpack.c.l.b16 %v140
    %v430 = vunpack.c.l.b16 %v141
    %v431 = vunpack.c.l.b16 %v142
    %v432 = vunpack.c.l.b16 %v143
    %v433 = vunpack.c.l.b16 %v144
    %v434 = vunpack.c.l.b16 %v145
    %v435 = vunpack.c.l.b16 %v146
    %v436 = vunpack.c.l.b16 %v147
    %v437 = vunpack.c.l.b16 %v148
    %v438 = vunpack.c.l.b16 %v149
    %v439 = vunpack.c.l.b16 %v150
    %v440 = vunpack.c.l.b16 %v151
    %v441 = vunpack.c.l.b16 %v152
    %v442 = vunpack.c.l.b16 %v153
    %v443 = vunpack.c.l.b16 %v154
    %v444 = vunpack.c.l.b16 %v155
    %v445 = vunpack.c.l.b16 %v156
    %v446 = vunpack.c.l.b16 %v157
    %v447 = vunpack.c.l.b16 %v158
    %v448 = vunpack.c.l.b16 %v159
    %v449 = vunpack.c.l.b16 %v160
    %v450 = vunpack.c.l.b16 %v161
    %v451 = vunpack.c.l.b16 %v162
    %v452 = vunpack.c.l.b16 %v163
    %v453 = vpack.c.b16 %v326, %v325
    %v454 = vpack.c.b16 %v328, %v327
    %v455 = vpack.c.b16 %v330, %v329
    %v456 = vpack.c.b16 %v332, %v331
    %v457 = vpack.c.b16 %v334, %v333
    %v458 = vpack.c.b16 %v336, %v335
    %v459 = vpack.c.b16 %v338, %v337
    %v460 = vpack.c.b16 %v340, %v339
    %v461 = vpack.c.b16 %v342, %v341
    %v462 = vpack.c.b16 %v344, %v343
    %v463 = vpack.c.b16 %v346, %v345
    %v464 = vpack.c.b16 %v348, %v347
    %v465 = vpack.c.b16 %v350, %v349
    %v466 = vpack.c.b16 %v352, %v351
    %v467 = vpack.c.b16 %v354, %v353
    %v468 = vpack.c.b16 %v356, %v355
    %v469 = vpack.c.b16 %v358, %v357
    %v470 = vpack.c.b16 %v360, %v359
    %v471 = vpack.c.b16 %v362, %v361
    %v472 = vpack.c.b16 %v364, %v363
    %v473 = vpack.c.b16 %v366, %v365
    %v474 = vpack.c.b16 %v368, %v367
    %v475 = vpack.c.b16 %v370, %v369
    %v476 = vpack.c.b16 %v372, %v371
    %v477 = vpack.c.b16 %v374, %v373
    %v478 = vpack.c.b16 %v376, %v375
    %v479 = vpack.c.b16 %v378, %v377
    %v480 = vpack.c.b16 %v380, %v379
    %v481 = vpack.c.b16 %v382, %v381
    %v482 = vpack.c.b16 %v384, %v383
    %v483 = vpack.c.b16 %v386, %v385
    %v484 = vpack.c.b16 %v388, %v387
    %v485 = vpack.c.b16 %v390, %v389
    %v486 = vpack.c.b16 %v392, %v391
    %v487 = vpack.c.b16 %v394, %v393
    %v488 = vpack.c.b16 %v396, %v395
    %v489 = vpack.c.b16 %v398, %v397
    %v490 = vpack.c.b16 %v400, %v399
    %v491 = vpack.c.b16 %v402, %v401
    %v492 = vpack.c.b16 %v404, %v403
    %v493 = vpack.c.b16 %v406, %v405
    %v494 = vpack.c.b16 %v408, %v407
    %v495 = vpack.c.b16 %v410, %v409
    %v496 = vpack.c.b16 %v412, %v411
    %v497 = vpack.c.b16 %v414, %v413
    %v498 = vpack.c.b16 %v416, %v415
    %v499 = vpack.c.b16 %v418, %v417
    %v500 = vpack.c.b16 %v420, %v419
    %v501 = vpack.c.b16 %v422, %v421
    %v502 = vpack.c.b16 %v424, %v423
    %v503 = vpack.c.b16 %v426, %v425
    %v504 = vpack.c.b16 %v428, %v427
    %v505 = vpack.c.b16 %v430, %v429
    %v506 = vpack.c.b16 %v432, %v431
    %v507 = vpack.c.b16 %v434, %v433
    %v508 = vpack.c.b16 %v436, %v435
    %v509 = vpack.c.b16 %v438, %v437
    %v510 = vpack.c.b16 %v440, %v439
    %v511 = vpack.c.b16 %v442, %v441
    %v512 = vpack.c.b16 %v444, %v443
    %v513 = vpack.c.b16 %v446, %v445
    %v514 = vpack.c.b16 %v448, %v447
    %v515 = vpack.c.b16 %v450, %v449
    %v516 = vpack.c.b16 %v452, %v451
    %581 = vmatprep.subr.bf16.mxu0 0
    %582 = vmatpush1.bf16.msra.mxu0 %v453
    %583 = vmatprep.subr.bf16.mxu0 0
    %584 = vmatpush1.bf16.msra.mxu0 %v454
    %585 = vmatprep.subr.bf16.mxu0 0
    %586 = vmatpush1.bf16.msra.mxu0 %v455
    %587 = vmatprep.subr.bf16.mxu0 0
    %588 = vmatpush1.bf16.msra.mxu0 %v456
    %589 = vmatprep.subr.bf16.mxu0 0
    %590 = vmatpush1.bf16.msra.mxu0 %v457
    %591 = vmatprep.subr.bf16.mxu0 0
    %592 = vmatpush1.bf16.msra.mxu0 %v458
    %593 = vmatprep.subr.bf16.mxu0 0
    %594 = vmatpush1.bf16.msra.mxu0 %v459
    %595 = vmatprep.subr.bf16.mxu0 0
    %596 = vmatpush1.bf16.msra.mxu0 %v460
    %597 = vmatprep.subr.bf16.mxu0 0
    %598 = vmatpush1.bf16.msra.mxu0 %v461
    %599 = vmatprep.subr.bf16.mxu0 0
    %600 = vmatpush1.bf16.msra.mxu0 %v462
    %601 = vmatprep.subr.bf16.mxu0 0
    %602 = vmatpush1.bf16.msra.mxu0 %v463
    %603 = vmatprep.subr.bf16.mxu0 0
    %604 = vmatpush1.bf16.msra.mxu0 %v464
    %605 = vmatprep.subr.bf16.mxu0 0
    %606 = vmatpush1.bf16.msra.mxu0 %v465
    %607 = vmatprep.subr.bf16.mxu0 0
    %608 = vmatpush1.bf16.msra.mxu0 %v466
    %609 = vmatprep.subr.bf16.mxu0 0
    %610 = vmatpush1.bf16.msra.mxu0 %v467
    %611 = vmatprep.subr.bf16.mxu0 0
    %612 = vmatpush1.bf16.msra.mxu0 %v468
    %613 = vmatprep.mubr.bf16.mxu0 %v182
    %614 = vmatmul.mubr.bf16.gmra.mrb[0].mxu0 %v181
    %v615 = vpop.f32.mrb[0].mxu0
    %v616 = vadd.f32 %v168, %v615
    %v617 = vpop.f32.mrb[0].mxu0
    %v618 = vpop.f32.mrb[0].mxu0
    %v619 = vpop.f32.mrb[0].mxu0
    %620 = vdwg.mxu0
    %621 = vmatprep.subr.bf16.mxu0 0
    %622 = vmatpush1.bf16.msra.mxu0 %v469
    %623 = vmatprep.subr.bf16.mxu0 0
    %624 = vmatpush1.bf16.msra.mxu0 %v470
    %625 = vmatprep.subr.bf16.mxu0 0
    %626 = vmatpush1.bf16.msra.mxu0 %v471
    %627 = vmatprep.subr.bf16.mxu0 0
    %628 = vmatpush1.bf16.msra.mxu0 %v472
    %629 = vmatprep.subr.bf16.mxu0 0
    %630 = vmatpush1.bf16.msra.mxu0 %v473
    %631 = vmatprep.subr.bf16.mxu0 0
    %632 = vmatpush1.bf16.msra.mxu0 %v474
    %633 = vmatprep.subr.bf16.mxu0 0
    %634 = vmatpush1.bf16.msra.mxu0 %v475
    %635 = vmatprep.subr.bf16.mxu0 0
    %636 = vmatpush1.bf16.msra.mxu0 %v476
    %637 = vmatprep.subr.bf16.mxu0 0
    %638 = vmatpush1.bf16.msra.mxu0 %v477
    %639 = vmatprep.subr.bf16.mxu0 0
    %640 = vmatpush1.bf16.msra.mxu0 %v478
    %641 = vmatprep.subr.bf16.mxu0 0
    %642 = vmatpush1.bf16.msra.mxu0 %v479
    %643 = vmatprep.subr.bf16.mxu0 0
    %644 = vmatpush1.bf16.msra.mxu0 %v480
    %645 = vmatprep.subr.bf16.mxu0 0
    %646 = vmatpush1.bf16.msra.mxu0 %v481
    %647 = vmatprep.subr.bf16.mxu0 0
    %648 = vmatpush1.bf16.msra.mxu0 %v482
    %649 = vmatprep.subr.bf16.mxu0 0
    %650 = vmatpush1.bf16.msra.mxu0 %v483
    %651 = vmatprep.subr.bf16.mxu0 0
    %652 = vmatpush1.bf16.msra.mxu0 %v484
    %653 = vmatprep.mubr.bf16.mxu0 %v184
    %654 = vmatmul.mubr.bf16.gmra.mrb[0].mxu0 %v183
    %v655 = vpop.f32.mrb[0].mxu0
    %v656 = vadd.f32 %v616, %v655
    %v657 = vpop.f32.mrb[0].mxu0
    %v658 = vpop.f32.mrb[0].mxu0
    %v659 = vpop.f32.mrb[0].mxu0
    %660 = vdwg.mxu0
    %661 = vmatprep.subr.bf16.mxu0 0
    %662 = vmatpush1.bf16.msra.mxu0 %v485
    %663 = vmatprep.subr.bf16.mxu0 0
    %664 = vmatpush1.bf16.msra.mxu0 %v486
    %665 = vmatprep.subr.bf16.mxu0 0
    %666 = vmatpush1.bf16.msra.mxu0 %v487
    %667 = vmatprep.subr.bf16.mxu0 0
    %668 = vmatpush1.bf16.msra.mxu0 %v488
    %669 = vmatprep.subr.bf16.mxu0 0
    %670 = vmatpush1.bf16.msra.mxu0 %v489
    %671 = vmatprep.subr.bf16.mxu0 0
    %672 = vmatpush1.bf16.msra.mxu0 %v490
    %673 = vmatprep.subr.bf16.mxu0 0
    %674 = vmatpush1.bf16.msra.mxu0 %v491
    %675 = vmatprep.subr.bf16.mxu0 0
    %676 = vmatpush1.bf16.msra.mxu0 %v492
    %677 = vmatprep.subr.bf16.mxu0 0
    %678 = vmatpush1.bf16.msra.mxu0 %v493
    %679 = vmatprep.subr.bf16.mxu0 0
    %680 = vmatpush1.bf16.msra.mxu0 %v494
    %681 = vmatprep.subr.bf16.mxu0 0
    %682 = vmatpush1.bf16.msra.mxu0 %v495
    %683 = vmatprep.subr.bf16.mxu0 0
    %684 = vmatpush1.bf16.msra.mxu0 %v496
    %685 = vmatprep.subr.bf16.mxu0 0
    %686 = vmatpush1.bf16.msra.mxu0 %v497
    %687 = vmatprep.subr.bf16.mxu0 0
    %688 = vmatpush1.bf16.msra.mxu0 %v498
    %689 = vmatprep.subr.bf16.mxu0 0
    %690 = vmatpush1.bf16.msra.mxu0 %v499
    %691 = vmatprep.subr.bf16.mxu0 0
    %692 = vmatpush1.bf16.msra.mxu0 %v500
    %693 = vmatprep.mubr.bf16.mxu0 %v186
    %694 = vmatmul.mubr.bf16.gmra.mrb[0].mxu0 %v185
    %v695 = vpop.f32.mrb[0].mxu0
    %v696 = vadd.f32 %v656, %v695
    %v697 = vpop.f32.mrb[0].mxu0
    %v698 = vpop.f32.mrb[0].mxu0
    %v699 = vpop.f32.mrb[0].mxu0
    %700 = vdwg.mxu0
    %701 = vmatprep.subr.bf16.mxu0 0
    %702 = vmatpush1.bf16.msra.mxu0 %v501
    %703 = vmatprep.subr.bf16.mxu0 0
    %704 = vmatpush1.bf16.msra.mxu0 %v502
    %705 = vmatprep.subr.bf16.mxu0 0
    %706 = vmatpush1.bf16.msra.mxu0 %v503
    %707 = vmatprep.subr.bf16.mxu0 0
    %708 = vmatpush1.bf16.msra.mxu0 %v504
    %709 = vmatprep.subr.bf16.mxu0 0
    %710 = vmatpush1.bf16.msra.mxu0 %v505
    %711 = vmatprep.subr.bf16.mxu0 0
    %712 = vmatpush1.bf16.msra.mxu0 %v506
    %713 = vmatprep.subr.bf16.mxu0 0
    %714 = vmatpush1.bf16.msra.mxu0 %v507
    %715 = vmatprep.subr.bf16.mxu0 0
    %716 = vmatpush1.bf16.msra.mxu0 %v508
    %717 = vmatprep.subr.bf16.mxu0 0
    %718 = vmatpush1.bf16.msra.mxu0 %v509
    %719 = vmatprep.subr.bf16.mxu0 0
    %720 = vmatpush1.bf16.msra.mxu0 %v510
    %721 = vmatprep.subr.bf16.mxu0 0
    %722 = vmatpush1.bf16.msra.mxu0 %v511
    %723 = vmatprep.subr.bf16.mxu0 0
    %724 = vmatpush1.bf16.msra.mxu0 %v512
    %725 = vmatprep.subr.bf16.mxu0 0
    %726 = vmatpush1.bf16.msra.mxu0 %v513
    %727 = vmatprep.subr.bf16.mxu0 0
    %728 = vmatpush1.bf16.msra.mxu0 %v514
    %729 = vmatprep.subr.bf16.mxu0 0
    %730 = vmatpush1.bf16.msra.mxu0 %v515
    %731 = vmatprep.subr.bf16.mxu0 0
    %732 = vmatpush1.bf16.msra.mxu0 %v516
    %733 = vmatprep.mubr.bf16.mxu0 %v188
    %734 = vmatmul.mubr.bf16.gmra.mrb[0].mxu0 %v187
    %v735 = vpop.f32.mrb[0].mxu0
    %v736 = vadd.f32 %v696, %v735
    %v737 = vpop.f32.mrb[0].mxu0
    %v738 = vpop.f32.mrb[0].mxu0
    %v739 = vpop.f32.mrb[0].mxu0
    %740 = vdwg.mxu0
    %v741 = vmax.f32 %v736, 0.0
    %v742 = vld [vmem:[%s2] sm:$0xff]
    %v743 = vld [vmem:[%s2 + $0x8] sm:$0xff]
    %v744 = vld [vmem:[%s2 + $0x10] sm:$0xff]
    %v745 = vld [vmem:[%s2 + $0x18] sm:$0xff]
    %v746 = vld [vmem:[%s2 + $0x20] sm:$0xff]
    %v747 = vld [vmem:[%s2 + $0x28] sm:$0xff]
    %v748 = vld [vmem:[%s2 + $0x30] sm:$0xff]
    %v749 = vld [vmem:[%s2 + $0x38] sm:$0xff]
    %v750 = vld [vmem:[%s2 + $0x40] sm:$0xff]
    %v751 = vld [vmem:[%s2 + $0x48] sm:$0xff]
    %v752 = vld [vmem:[%s2 + $0x50] sm:$0xff]
    %v753 = vld [vmem:[%s2 + $0x58] sm:$0xff]
    %v754 = vld [vmem:[%s2 + $0x60] sm:$0xff]
    %v755 = vld [vmem:[%s2 + $0x68] sm:$0xff]
    %v756 = vld [vmem:[%s2 + $0x70] sm:$0xff]
    %v757 = vld [vmem:[%s2 + $0x78] sm:$0xff]
    %v758 = vld [vmem:[%s3 + $0x1] sm:$0x1]
    %v759 = vlaneseq
    %v760 = vshrl.u32 %v759, 7
    %v761 = vsub.s32 0, %v760
    %v762 = vrot.slane %v758, %v761
    %763 = vmatprep.subr.mxu0 0.0
    %764 = vmatpush1.msra.mxu0 %v742
    %765 = vmatprep.subr.mxu0 0.0
    %766 = vmatpush1.msra.mxu0 %v743
    %767 = vmatprep.subr.mxu0 0.0
    %768 = vmatpush1.msra.mxu0 %v744
    %769 = vmatprep.subr.mxu0 0.0
    %770 = vmatpush1.msra.mxu0 %v745
    %771 = vmatprep.subr.mxu0 0.0
    %772 = vmatpush1.msra.mxu0 %v746
    %773 = vmatprep.subr.mxu0 0.0
    %774 = vmatpush1.msra.mxu0 %v747
    %775 = vmatprep.subr.mxu0 0.0
    %776 = vmatpush1.msra.mxu0 %v748
    %777 = vmatprep.subr.mxu0 0.0
    %778 = vmatpush1.msra.mxu0 %v749
    %779 = vmatprep.subr.mxu0 0.0
    %780 = vmatpush1.msra.mxu0 %v750
    %781 = vmatprep.subr.mxu0 0.0
    %782 = vmatpush1.msra.mxu0 %v751
    %783 = vmatprep.subr.mxu0 0.0
    %784 = vmatpush1.msra.mxu0 %v752
    %785 = vmatprep.subr.mxu0 0.0
    %786 = vmatpush1.msra.mxu0 %v753
    %787 = vmatprep.subr.mxu0 0.0
    %788 = vmatpush1.msra.mxu0 %v754
    %789 = vmatprep.subr.mxu0 0.0
    %790 = vmatpush1.msra.mxu0 %v755
    %791 = vmatprep.subr.mxu0 0.0
    %792 = vmatpush1.msra.mxu0 %v756
    %793 = vmatprep.subr.mxu0 0.0
    %794 = vmatpush1.msra.mxu0 %v757
    %795 = vmatprep.subr.mxu0 0.0
    %796 = vmatpush1.msra.mxu0 0.0
    %797 = vmatprep.subr.mxu0 0.0
    %798 = vmatpush1.msra.mxu0 0.0
    %799 = vmatprep.subr.mxu0 0.0
    %800 = vmatpush1.msra.mxu0 0.0
    %801 = vmatprep.subr.mxu0 0.0
    %802 = vmatpush1.msra.mxu0 0.0
    %803 = vmatprep.subr.mxu0 0.0
    %804 = vmatpush1.msra.mxu0 0.0
    %805 = vmatprep.subr.mxu0 0.0
    %806 = vmatpush1.msra.mxu0 0.0
    %807 = vmatprep.subr.mxu0 0.0
    %808 = vmatpush1.msra.mxu0 0.0
    %809 = vmatprep.subr.mxu0 0.0
    %810 = vmatpush1.msra.mxu0 0.0
    %811 = vmatprep.subr.mxu0 0.0
    %812 = vmatpush1.msra.mxu0 0.0
    %813 = vmatprep.subr.mxu0 0.0
    %814 = vmatpush1.msra.mxu0 0.0
    %815 = vmatprep.subr.mxu0 0.0
    %816 = vmatpush1.msra.mxu0 0.0
    %817 = vmatprep.subr.mxu0 0.0
    %818 = vmatpush1.msra.mxu0 0.0
    %819 = vmatprep.subr.mxu0 0.0
    %820 = vmatpush1.msra.mxu0 0.0
    %821 = vmatprep.subr.mxu0 0.0
    %822 = vmatpush1.msra.mxu0 0.0
    %823 = vmatprep.subr.mxu0 0.0
    %824 = vmatpush1.msra.mxu0 0.0
    %825 = vmatprep.subr.mxu0 0.0
    %826 = vmatpush1.msra.mxu0 0.0
    %827 = vmatprep.mubr.f32.mxu0 0.0
    %828 = vmatmul.mubr.f32.gmra.mrb[0].mxu0 %v741
    %v829 = vpop.f32.mrb[0].mxu0
    %v830 = vadd.f32 %v762, %v829
    %v831 = vpop.f32.mrb[0].mxu0
    %832 = vdwg.mxu0
    %833 = vst [vmem:[%s4] sm:$0xff] %v830
    // Predicated region
    $region22: #{dueling_forward.1} parent=1 // pred_check
      _
    $region23: #{dueling_forward.1} parent=1 // pred_check_branch
      %835 = sbr.rel (0) target = $region25
    $region24: #{dueling_forward.1} parent=1 // pred_region
      _
    $region25: #{dueling_forward.1} parent=1 // pred_fallthru
      _
    // Predicated region
    $region26: #{dueling_forward.1} parent=1 // pred_check
      _
    $region27: #{dueling_forward.1} parent=1 // pred_check_branch
      %837 = sbr.rel (0) target = $region29
    $region28: #{dueling_forward.1} parent=1 // pred_region
      _
    $region29: #{dueling_forward.1} parent=1 // pred_fallthru
      _
    %838 = vsyncpa [#allocation3], 1

</llo_original>
